<compile_context>
chip_gen: v5e
topology: v5e:2x2
jax: 0.10.0
libtpu: 0.0.40
codegen_flags: <defaults>
</compile_context>

<pallas_src>
import math

import jax
import jax.numpy as jnp
from jax import lax
from jax.experimental import pallas as pl
from jax.experimental.pallas import tpu as pltpu

_OUT_LANES = 128  # lane-dense output width


def _round_up(x, m):
    return ((x + m - 1) // m) * m


def _onehot_embed(idx_col, table):
    """idx_col: (TB, 1) int32; table: (V, E) f32 -> (TB, E) via one-hot matmul (MXU)."""
    tb = idx_col.shape[0]
    v = table.shape[0]
    row = lax.broadcasted_iota(jnp.int32, (tb, v), 1)
    onehot = (row == idx_col).astype(jnp.float32)
    return jnp.dot(onehot, table, preferred_element_type=jnp.float32)


def r_actor_emb_kernel(states_ref, pooled_ref, gumbel_ref,
                       node_tab_ref, time_tab_ref, agent_tab_ref,
                       w1_ref, b1_ref, w2_ref, b2_ref, w3_ref, b3_ref,
                       act_ref, logp_ref):
    TB, C = states_ref.shape          # C = defender_num + 3
    n_node_cols = C - 2               # defender_num + 1
    E = node_tab_ref.shape[1]         # state_emb_dim
    G = pooled_ref.shape[1]           # gnn_output_dim
    H = w1_ref.shape[1]               # hidden_size
    A = w3_ref.shape[1]               # action_dim

    states = states_ref[...]          # (TB, C) int32
    w1 = w1_ref[...]                  # (policy_input_dim, H)

    # --- embedding lookups fused into linear1 ---------------------------------
    acc = jnp.zeros((TB, H), jnp.float32)
    off = 0
    for c in range(n_node_cols):                              # node_idx columns
        emb = _onehot_embed(states[:, c:c + 1], node_tab_ref[...])
        acc = acc + jnp.dot(emb, w1[off:off + E, :],
                            preferred_element_type=jnp.float32)
        off += E
    emb_t = _onehot_embed(states[:, C - 2:C - 1], time_tab_ref[...])   # time_idx
    acc = acc + jnp.dot(emb_t, w1[off:off + E, :],
                        preferred_element_type=jnp.float32)
    off += E
    emb_a = _onehot_embed(states[:, C - 1:C], agent_tab_ref[...])      # agent_id
    acc = acc + jnp.dot(emb_a, w1[off:off + E, :],
                        preferred_element_type=jnp.float32)
    off += E
    # augmentation segment: pooled GNN node embedding
    acc = acc + jnp.dot(pooled_ref[...], w1[off:off + G, :],
                        preferred_element_type=jnp.float32)

    h1 = jnp.maximum(acc + b1_ref[...], 0.0)                  # linear1 + ReLU

    h2 = jnp.dot(h1, w2_ref[...], preferred_element_type=jnp.float32) + b2_ref[...]
    h2 = jnp.maximum(h2, 0.0)                                 # linear2 + ReLU

    logits = jnp.dot(h2, w3_ref[...], preferred_element_type=jnp.float32) + b3_ref[...]

    # --- log-softmax ----------------------------------------------------------
    m = jnp.max(logits, axis=-1, keepdims=True)
    z = logits - m
    log_probs = z - jnp.log(jnp.sum(jnp.exp(z), axis=-1, keepdims=True))  # (TB, A)

    # --- Categorical(probs).sample() == argmax(log_probs + gumbel) ------------
    perturbed = log_probs + gumbel_ref[...]
    col = lax.broadcasted_iota(jnp.int32, (TB, A), 1)
    maxp = jnp.max(perturbed, axis=-1, keepdims=True)
    action = jnp.min(jnp.where(perturbed >= maxp, col, A), axis=-1, keepdims=True)
    action = jnp.minimum(action, A - 1)                       # guard degenerate rows

    # m.log_prob(action): gather via masked lane-sum (no float one-hot matmul)
    chosen_logp = jnp.sum(jnp.where(col == action, log_probs, 0.0),
                          axis=-1, keepdims=True)             # (TB, 1)

    # --- lane-dense stores; wrapper slices lane 0 ------------------------------
    act_ref[...] = jnp.broadcast_to(action, (TB, _OUT_LANES)).astype(jnp.int32)
    logp_ref[...] = jnp.broadcast_to(chosen_logp, (TB, _OUT_LANES))


def r_actor_forward(states, pooled_node_embs, params, emb_tables, key, *, block_b=256):
    """Returns (actions[B,1] int32, action_log_probs[B,1] float32)."""
    node_tab, time_tab, agent_tab = emb_tables
    w1, b1, w2, b2, w3, b3 = params
    B, C = states.shape
    G = pooled_node_embs.shape[1]
    A = w3.shape[1]

    # batch tile: multiple of 8 (f32 sublane); pad B to a multiple of it
    TB = min(block_b, _round_up(B, 8))
    B_pad = _round_up(B, TB)
    if B_pad != B:
        # index 0 is valid in every embedding table; padded rows are sliced off below
        states = jnp.pad(states, ((0, B_pad - B), (0, 0)))
        pooled_node_embs = jnp.pad(pooled_node_embs, ((0, B_pad - B), (0, 0)))

    # Gumbel noise for Categorical sampling (generated outside the kernel:
    # pltpu.prng_* has no CPU/interpret lowering).
    gumbel = jax.random.gumbel(key, (B_pad, A), jnp.float32)

    batch_map = lambda i: (i, 0)
    vmem_full = pl.BlockSpec(memory_space=pltpu.MemorySpace.VMEM)  # resident, untiled

    grid_spec = pltpu.PrefetchScalarGridSpec(
        num_scalar_prefetch=0,
        grid=(B_pad // TB,),
        in_specs=[
            pl.BlockSpec((TB, C), batch_map),     # states (int indices)
            pl.BlockSpec((TB, G), batch_map),     # pooled_node_embs
            pl.BlockSpec((TB, A), batch_map),     # gumbel noise
            vmem_full,                            # node_idx embedding table
            vmem_full,                            # time_idx embedding table
            vmem_full,                            # agent_id embedding table
            vmem_full, vmem_full,                 # w1, b1
            vmem_full, vmem_full,                 # w2, b2
            vmem_full, vmem_full,                 # w3, b3
        ],
        out_specs=(
            pl.BlockSpec((TB, _OUT_LANES), batch_map),
            pl.BlockSpec((TB, _OUT_LANES), batch_map),
        ),
    )

    act_pad, logp_pad = pl.pallas_call(
        r_actor_emb_kernel,
        out_shape=(
            jax.ShapeDtypeStruct((B_pad, _OUT_LANES), jnp.int32),
            jax.ShapeDtypeStruct((B_pad, _OUT_LANES), jnp.float32),
        ),
        grid_spec=grid_spec,
        compiler_params=pltpu.CompilerParams(
            dimension_semantics=("parallel",)),   # megacore sharding on v7x
    )(states, pooled_node_embs, gumbel,
      node_tab, time_tab, agent_tab,
      w1, b1, w2, b2, w3, b3)

    return act_pad[:B, :1], logp_pad[:B, :1]


def init_params(key, policy_input_dim, hidden_size, action_dim):
    """Kaiming-uniform-style init; weights stored as (in, out) (transposed vs torch)."""
    ks = jax.random.split(key, 6)

    def kaiming_uniform(k, fan_in, fan_out):
        bound = math.sqrt(6.0 / fan_in)
        return jax.random.uniform(k, (fan_in, fan_out), jnp.float32, -bound, bound)

    def bias_init(k, fan_in, fan_out):
        bound = 1.0 / math.sqrt(fan_in)
        return jax.random.uniform(k, (1, fan_out), jnp.float32, -bound, bound)

    w1 = kaiming_uniform(ks[0], policy_input_dim, hidden_size)
    b1 = bias_init(ks[1], policy_input_dim, hidden_size)
    w2 = kaiming_uniform(ks[2], hidden_size, hidden_size)
    b2 = bias_init(ks[3], hidden_size, hidden_size)
    w3 = kaiming_uniform(ks[4], hidden_size, action_dim)
    b3 = bias_init(ks[5], hidden_size, action_dim)
    return (w1, b1, w2, b2, w3, b3)


def init_emb_tables(key, node_num, max_time_horizon, defender_num, state_emb_dim):
    k1, k2, k3 = jax.random.split(key, 3)
    node_tab = jax.random.normal(k1, (node_num + 1, state_emb_dim), jnp.float32)
    time_tab = jax.random.normal(k2, (max_time_horizon, state_emb_dim), jnp.float32)
    agent_tab = jax.random.normal(k3, (defender_num, state_emb_dim), jnp.float32)
    return (node_tab, time_tab, agent_tab)


if __name__ == "__main__":
    # Small shapes consistent with the module (use_augmentation=True path)
    batch = 8
    state_emb_dim = 8
    defender_num = 3
    node_num = 20
    max_time_horizon = 50
    gnn_output_dim = 16
    hidden_size = 32
    action_dim = 8
    policy_input_dim = state_emb_dim * (defender_num + 3) + gnn_output_dim

    root = jax.random.PRNGKey(0)
    k_par, k_emb, k_node, k_time, k_agent, k_pool, k_sample = jax.random.split(root, 7)

    params = init_params(k_par, policy_input_dim, hidden_size, action_dim)
    emb_tables = init_emb_tables(k_emb, node_num, max_time_horizon,
                                 defender_num, state_emb_dim)

    node_idx = jax.random.randint(k_node, (batch, defender_num + 1), 0, node_num + 1,
                                  dtype=jnp.int32)
    time_idx = jax.random.randint(k_time, (batch, 1), 0, max_time_horizon, dtype=jnp.int32)
    agent_id = jax.random.randint(k_agent, (batch, 1), 0, defender_num, dtype=jnp.int32)
    states = jnp.concatenate([node_idx, time_idx, agent_id], axis=1)       # (B, C) int32
    pooled = jax.random.normal(k_pool, (batch, gnn_output_dim), jnp.float32)

    actions, action_log_probs = r_actor_forward(states, pooled, params, emb_tables, k_sample)
    jax.block_until_ready((actions, action_log_probs))

    assert actions.shape == (batch, 1) and action_log_probs.shape == (batch, 1)
    assert bool(jnp.all(actions >= 0)) and bool(jnp.all(actions < action_dim))
    assert bool(jnp.all(action_log_probs <= 1e-5))

    # Pure-JAX reference for the deterministic part (embeddings + MLP + log-softmax):
    # the kernel's reported log_prob must equal log_softmax gathered at its own action.
    w1, b1, w2, b2, w3, b3 = params
    node_tab, time_tab, agent_tab = emb_tables
    node_emb = node_tab[states[:, :-2]].reshape(batch, -1)
    time_emb = time_tab[states[:, -2]]
    agent_emb = agent_tab[states[:, -1]]
    state_emb = jnp.concatenate([node_emb, time_emb, agent_emb, pooled], axis=1)
    x = jax.nn.relu(state_emb @ w1 + b1)
    x = jax.nn.relu(x @ w2 + b2)
    ref_logp = jax.nn.log_softmax(x @ w3 + b3, axis=-1)
    gathered = jnp.take_along_axis(ref_logp, actions, axis=1)
    assert bool(jnp.allclose(gathered, action_log_probs, atol=1e-4))

    print("KERNEL_OK")
</pallas_src>

<mosaic_0001>
module attributes {stable_mosaic.version = 11 : i64} {
  func.func @r_actor_emb_kernel(%arg0: i32, %arg1: memref<8x6xi32, #tpu.memory_space<vmem>>, %arg2: memref<8x16xf32, #tpu.memory_space<vmem>>, %arg3: memref<8x8xf32, #tpu.memory_space<vmem>>, %arg4: memref<21x8xf32, #tpu.memory_space<vmem>>, %arg5: memref<50x8xf32, #tpu.memory_space<vmem>>, %arg6: memref<3x8xf32, #tpu.memory_space<vmem>>, %arg7: memref<64x32xf32, #tpu.memory_space<vmem>>, %arg8: memref<1x32xf32, #tpu.memory_space<vmem>>, %arg9: memref<32x32xf32, #tpu.memory_space<vmem>>, %arg10: memref<1x32xf32, #tpu.memory_space<vmem>>, %arg11: memref<32x8xf32, #tpu.memory_space<vmem>>, %arg12: memref<1x8xf32, #tpu.memory_space<vmem>>, %arg13: memref<8x128xi32, #tpu.memory_space<vmem>>, %arg14: memref<8x128xf32, #tpu.memory_space<vmem>>) attributes {dimension_semantics = [#tpu.dimension_semantics<parallel>], iteration_bounds = array<i64: 1>, scalar_prefetch = 0 : i64, scratch_operands = 0 : i64, tpu.core_type = #tpu.core_type<tc>, window_params = [{transform_indices = @transform_0, window_bounds = array<i64: 8, 6>}, {transform_indices = @transform_1, window_bounds = array<i64: 8, 16>}, {transform_indices = @transform_2, window_bounds = array<i64: 8, 8>}, {pipeline_mode = #tpu.pipeline_mode<synchronous>, transform_indices = @transform_3, window_bounds = array<i64: 21, 8>}, {pipeline_mode = #tpu.pipeline_mode<synchronous>, transform_indices = @transform_4, window_bounds = array<i64: 50, 8>}, {pipeline_mode = #tpu.pipeline_mode<synchronous>, transform_indices = @transform_5, window_bounds = array<i64: 3, 8>}, {pipeline_mode = #tpu.pipeline_mode<synchronous>, transform_indices = @transform_6, window_bounds = array<i64: 64, 32>}, {pipeline_mode = #tpu.pipeline_mode<synchronous>, transform_indices = @transform_7, window_bounds = array<i64: 1, 32>}, {pipeline_mode = #tpu.pipeline_mode<synchronous>, transform_indices = @transform_8, window_bounds = array<i64: 32, 32>}, {pipeline_mode = #tpu.pipeline_mode<synchronous>, transform_indices = @transform_9, window_bounds = array<i64: 1, 32>}, {pipeline_mode = #tpu.pipeline_mode<synchronous>, transform_indices = @transform_10, window_bounds = array<i64: 32, 8>}, {pipeline_mode = #tpu.pipeline_mode<synchronous>, transform_indices = @transform_11, window_bounds = array<i64: 1, 8>}, {transform_indices = @transform_12, window_bounds = array<i64: 8, 128>}, {transform_indices = @transform_13, window_bounds = array<i64: 8, 128>}]} {
    %c0 = arith.constant 0 : index
    %c0_0 = arith.constant 0 : index
    %0 = vector.load %arg1[%c0, %c0_0] : memref<8x6xi32, #tpu.memory_space<vmem>>, vector<8x6xi32>
    %c0_1 = arith.constant 0 : index
    %c0_2 = arith.constant 0 : index
    %1 = vector.load %arg7[%c0_1, %c0_2] : memref<64x32xf32, #tpu.memory_space<vmem>>, vector<64x32xf32>
    %cst = arith.constant 0.000000e+00 : f32
    %2 = vector.broadcast %cst : f32 to vector<8x32xf32>
    %3 = vector.extract_strided_slice %0 {offsets = [0, 0], sizes = [8, 1], strides = [1, 1]} : vector<8x6xi32> to vector<8x1xi32>
    %c0_3 = arith.constant 0 : index
    %c0_4 = arith.constant 0 : index
    %4 = vector.load %arg4[%c0_3, %c0_4] : memref<21x8xf32, #tpu.memory_space<vmem>>, vector<21x8xf32>
    %5 = tpu.iota {dimensions = array<i32: 1>} : vector<8x21xi32>
    %6 = vector.broadcast %3 : vector<8x1xi32> to vector<8x21xi32>
    %7 = arith.cmpi eq, %5, %6 : vector<8x21xi32>
    %8 = arith.extui %7 : vector<8x21xi1> to vector<8x21xi32>
    %9 = arith.sitofp %8 : vector<8x21xi32> to vector<8x21xf32>
    %cst_5 = arith.constant dense<0.000000e+00> : vector<8x8xf32>
    %10 = tpu.matmul %9, %4, %cst_5 {dimension_numbers = #tpu.dot_dimension_numbers<[1], [0], [0], [1], [0, 0, 1, 1], [], []>} : vector<8x21xf32>, vector<21x8xf32>, vector<8x8xf32> -> vector<8x8xf32>
    %11 = vector.extract_strided_slice %1 {offsets = [0, 0], sizes = [8, 32], strides = [1, 1]} : vector<64x32xf32> to vector<8x32xf32>
    %cst_6 = arith.constant dense<0.000000e+00> : vector<8x32xf32>
    %12 = tpu.matmul %10, %11, %cst_6 {dimension_numbers = #tpu.dot_dimension_numbers<[1], [0], [0], [1], [0, 0, 1, 1], [], []>} : vector<8x8xf32>, vector<8x32xf32>, vector<8x32xf32> -> vector<8x32xf32>
    %13 = arith.addf %2, %12 : vector<8x32xf32>
    %14 = vector.extract_strided_slice %0 {offsets = [0, 1], sizes = [8, 1], strides = [1, 1]} : vector<8x6xi32> to vector<8x1xi32>
    %c0_7 = arith.constant 0 : index
    %c0_8 = arith.constant 0 : index
    %15 = vector.load %arg4[%c0_7, %c0_8] : memref<21x8xf32, #tpu.memory_space<vmem>>, vector<21x8xf32>
    %16 = tpu.iota {dimensions = array<i32: 1>} : vector<8x21xi32>
    %17 = vector.broadcast %14 : vector<8x1xi32> to vector<8x21xi32>
    %18 = arith.cmpi eq, %16, %17 : vector<8x21xi32>
    %19 = arith.extui %18 : vector<8x21xi1> to vector<8x21xi32>
    %20 = arith.sitofp %19 : vector<8x21xi32> to vector<8x21xf32>
    %cst_9 = arith.constant dense<0.000000e+00> : vector<8x8xf32>
    %21 = tpu.matmul %20, %15, %cst_9 {dimension_numbers = #tpu.dot_dimension_numbers<[1], [0], [0], [1], [0, 0, 1, 1], [], []>} : vector<8x21xf32>, vector<21x8xf32>, vector<8x8xf32> -> vector<8x8xf32>
    %22 = vector.extract_strided_slice %1 {offsets = [8, 0], sizes = [8, 32], strides = [1, 1]} : vector<64x32xf32> to vector<8x32xf32>
    %cst_10 = arith.constant dense<0.000000e+00> : vector<8x32xf32>
    %23 = tpu.matmul %21, %22, %cst_10 {dimension_numbers = #tpu.dot_dimension_numbers<[1], [0], [0], [1], [0, 0, 1, 1], [], []>} : vector<8x8xf32>, vector<8x32xf32>, vector<8x32xf32> -> vector<8x32xf32>
    %24 = arith.addf %13, %23 : vector<8x32xf32>
    %25 = vector.extract_strided_slice %0 {offsets = [0, 2], sizes = [8, 1], strides = [1, 1]} : vector<8x6xi32> to vector<8x1xi32>
    %c0_11 = arith.constant 0 : index
    %c0_12 = arith.constant 0 : index
    %26 = vector.load %arg4[%c0_11, %c0_12] : memref<21x8xf32, #tpu.memory_space<vmem>>, vector<21x8xf32>
    %27 = tpu.iota {dimensions = array<i32: 1>} : vector<8x21xi32>
    %28 = vector.broadcast %25 : vector<8x1xi32> to vector<8x21xi32>
    %29 = arith.cmpi eq, %27, %28 : vector<8x21xi32>
    %30 = arith.extui %29 : vector<8x21xi1> to vector<8x21xi32>
    %31 = arith.sitofp %30 : vector<8x21xi32> to vector<8x21xf32>
    %cst_13 = arith.constant dense<0.000000e+00> : vector<8x8xf32>
    %32 = tpu.matmul %31, %26, %cst_13 {dimension_numbers = #tpu.dot_dimension_numbers<[1], [0], [0], [1], [0, 0, 1, 1], [], []>} : vector<8x21xf32>, vector<21x8xf32>, vector<8x8xf32> -> vector<8x8xf32>
    %33 = vector.extract_strided_slice %1 {offsets = [16, 0], sizes = [8, 32], strides = [1, 1]} : vector<64x32xf32> to vector<8x32xf32>
    %cst_14 = arith.constant dense<0.000000e+00> : vector<8x32xf32>
    %34 = tpu.matmul %32, %33, %cst_14 {dimension_numbers = #tpu.dot_dimension_numbers<[1], [0], [0], [1], [0, 0, 1, 1], [], []>} : vector<8x8xf32>, vector<8x32xf32>, vector<8x32xf32> -> vector<8x32xf32>
    %35 = arith.addf %24, %34 : vector<8x32xf32>
    %36 = vector.extract_strided_slice %0 {offsets = [0, 3], sizes = [8, 1], strides = [1, 1]} : vector<8x6xi32> to vector<8x1xi32>
    %c0_15 = arith.constant 0 : index
    %c0_16 = arith.constant 0 : index
    %37 = vector.load %arg4[%c0_15, %c0_16] : memref<21x8xf32, #tpu.memory_space<vmem>>, vector<21x8xf32>
    %38 = tpu.iota {dimensions = array<i32: 1>} : vector<8x21xi32>
    %39 = vector.broadcast %36 : vector<8x1xi32> to vector<8x21xi32>
    %40 = arith.cmpi eq, %38, %39 : vector<8x21xi32>
    %41 = arith.extui %40 : vector<8x21xi1> to vector<8x21xi32>
    %42 = arith.sitofp %41 : vector<8x21xi32> to vector<8x21xf32>
    %cst_17 = arith.constant dense<0.000000e+00> : vector<8x8xf32>
    %43 = tpu.matmul %42, %37, %cst_17 {dimension_numbers = #tpu.dot_dimension_numbers<[1], [0], [0], [1], [0, 0, 1, 1], [], []>} : vector<8x21xf32>, vector<21x8xf32>, vector<8x8xf32> -> vector<8x8xf32>
    %44 = vector.extract_strided_slice %1 {offsets = [24, 0], sizes = [8, 32], strides = [1, 1]} : vector<64x32xf32> to vector<8x32xf32>
    %cst_18 = arith.constant dense<0.000000e+00> : vector<8x32xf32>
    %45 = tpu.matmul %43, %44, %cst_18 {dimension_numbers = #tpu.dot_dimension_numbers<[1], [0], [0], [1], [0, 0, 1, 1], [], []>} : vector<8x8xf32>, vector<8x32xf32>, vector<8x32xf32> -> vector<8x32xf32>
    %46 = arith.addf %35, %45 : vector<8x32xf32>
    %47 = vector.extract_strided_slice %0 {offsets = [0, 4], sizes = [8, 1], strides = [1, 1]} : vector<8x6xi32> to vector<8x1xi32>
    %c0_19 = arith.constant 0 : index
    %c0_20 = arith.constant 0 : index
    %48 = vector.load %arg5[%c0_19, %c0_20] : memref<50x8xf32, #tpu.memory_space<vmem>>, vector<50x8xf32>
    %49 = tpu.iota {dimensions = array<i32: 1>} : vector<8x50xi32>
    %50 = vector.broadcast %47 : vector<8x1xi32> to vector<8x50xi32>
    %51 = arith.cmpi eq, %49, %50 : vector<8x50xi32>
    %52 = arith.extui %51 : vector<8x50xi1> to vector<8x50xi32>
    %53 = arith.sitofp %52 : vector<8x50xi32> to vector<8x50xf32>
    %cst_21 = arith.constant dense<0.000000e+00> : vector<8x8xf32>
    %54 = tpu.matmul %53, %48, %cst_21 {dimension_numbers = #tpu.dot_dimension_numbers<[1], [0], [0], [1], [0, 0, 1, 1], [], []>} : vector<8x50xf32>, vector<50x8xf32>, vector<8x8xf32> -> vector<8x8xf32>
    %55 = vector.extract_strided_slice %1 {offsets = [32, 0], sizes = [8, 32], strides = [1, 1]} : vector<64x32xf32> to vector<8x32xf32>
    %cst_22 = arith.constant dense<0.000000e+00> : vector<8x32xf32>
    %56 = tpu.matmul %54, %55, %cst_22 {dimension_numbers = #tpu.dot_dimension_numbers<[1], [0], [0], [1], [0, 0, 1, 1], [], []>} : vector<8x8xf32>, vector<8x32xf32>, vector<8x32xf32> -> vector<8x32xf32>
    %57 = arith.addf %46, %56 : vector<8x32xf32>
    %58 = vector.extract_strided_slice %0 {offsets = [0, 5], sizes = [8, 1], strides = [1, 1]} : vector<8x6xi32> to vector<8x1xi32>
    %c0_23 = arith.constant 0 : index
    %c0_24 = arith.constant 0 : index
    %59 = vector.load %arg6[%c0_23, %c0_24] : memref<3x8xf32, #tpu.memory_space<vmem>>, vector<3x8xf32>
    %60 = tpu.iota {dimensions = array<i32: 1>} : vector<8x3xi32>
    %61 = vector.broadcast %58 : vector<8x1xi32> to vector<8x3xi32>
    %62 = arith.cmpi eq, %60, %61 : vector<8x3xi32>
    %63 = arith.extui %62 : vector<8x3xi1> to vector<8x3xi32>
    %64 = arith.sitofp %63 : vector<8x3xi32> to vector<8x3xf32>
    %cst_25 = arith.constant dense<0.000000e+00> : vector<8x8xf32>
    %65 = tpu.matmul %64, %59, %cst_25 {dimension_numbers = #tpu.dot_dimension_numbers<[1], [0], [0], [1], [0, 0, 1, 1], [], []>} : vector<8x3xf32>, vector<3x8xf32>, vector<8x8xf32> -> vector<8x8xf32>
    %66 = vector.extract_strided_slice %1 {offsets = [40, 0], sizes = [8, 32], strides = [1, 1]} : vector<64x32xf32> to vector<8x32xf32>
    %cst_26 = arith.constant dense<0.000000e+00> : vector<8x32xf32>
    %67 = tpu.matmul %65, %66, %cst_26 {dimension_numbers = #tpu.dot_dimension_numbers<[1], [0], [0], [1], [0, 0, 1, 1], [], []>} : vector<8x8xf32>, vector<8x32xf32>, vector<8x32xf32> -> vector<8x32xf32>
    %68 = arith.addf %57, %67 : vector<8x32xf32>
    %c0_27 = arith.constant 0 : index
    %c0_28 = arith.constant 0 : index
    %69 = vector.load %arg2[%c0_27, %c0_28] : memref<8x16xf32, #tpu.memory_space<vmem>>, vector<8x16xf32>
    %70 = vector.extract_strided_slice %1 {offsets = [48, 0], sizes = [16, 32], strides = [1, 1]} : vector<64x32xf32> to vector<16x32xf32>
    %cst_29 = arith.constant dense<0.000000e+00> : vector<8x32xf32>
    %71 = tpu.matmul %69, %70, %cst_29 {dimension_numbers = #tpu.dot_dimension_numbers<[1], [0], [0], [1], [0, 0, 1, 1], [], []>} : vector<8x16xf32>, vector<16x32xf32>, vector<8x32xf32> -> vector<8x32xf32>
    %72 = arith.addf %68, %71 : vector<8x32xf32>
    %c0_30 = arith.constant 0 : index
    %c0_31 = arith.constant 0 : index
    %73 = vector.load %arg8[%c0_30, %c0_31] : memref<1x32xf32, #tpu.memory_space<vmem>>, vector<1x32xf32>
    %74 = vector.broadcast %73 : vector<1x32xf32> to vector<8x32xf32>
    %75 = arith.addf %72, %74 : vector<8x32xf32>
    %cst_32 = arith.constant 0.000000e+00 : f32
    %76 = vector.broadcast %cst_32 : f32 to vector<8x32xf32>
    %77 = arith.maximumf %75, %76 : vector<8x32xf32>
    %c0_33 = arith.constant 0 : index
    %c0_34 = arith.constant 0 : index
    %78 = vector.load %arg9[%c0_33, %c0_34] : memref<32x32xf32, #tpu.memory_space<vmem>>, vector<32x32xf32>
    %cst_35 = arith.constant dense<0.000000e+00> : vector<8x32xf32>
    %79 = tpu.matmul %77, %78, %cst_35 {dimension_numbers = #tpu.dot_dimension_numbers<[1], [0], [0], [1], [0, 0, 1, 1], [], []>} : vector<8x32xf32>, vector<32x32xf32>, vector<8x32xf32> -> vector<8x32xf32>
    %c0_36 = arith.constant 0 : index
    %c0_37 = arith.constant 0 : index
    %80 = vector.load %arg10[%c0_36, %c0_37] : memref<1x32xf32, #tpu.memory_space<vmem>>, vector<1x32xf32>
    %81 = vector.broadcast %80 : vector<1x32xf32> to vector<8x32xf32>
    %82 = arith.addf %79, %81 : vector<8x32xf32>
    %cst_38 = arith.constant 0.000000e+00 : f32
    %83 = vector.broadcast %cst_38 : f32 to vector<8x32xf32>
    %84 = arith.maximumf %82, %83 : vector<8x32xf32>
    %c0_39 = arith.constant 0 : index
    %c0_40 = arith.constant 0 : index
    %85 = vector.load %arg11[%c0_39, %c0_40] : memref<32x8xf32, #tpu.memory_space<vmem>>, vector<32x8xf32>
    %cst_41 = arith.constant dense<0.000000e+00> : vector<8x8xf32>
    %86 = tpu.matmul %84, %85, %cst_41 {dimension_numbers = #tpu.dot_dimension_numbers<[1], [0], [0], [1], [0, 0, 1, 1], [], []>} : vector<8x32xf32>, vector<32x8xf32>, vector<8x8xf32> -> vector<8x8xf32>
    %c0_42 = arith.constant 0 : index
    %c0_43 = arith.constant 0 : index
    %87 = vector.load %arg12[%c0_42, %c0_43] : memref<1x8xf32, #tpu.memory_space<vmem>>, vector<1x8xf32>
    %88 = vector.broadcast %87 : vector<1x8xf32> to vector<8x8xf32>
    %89 = arith.addf %86, %88 : vector<8x8xf32>
    %cst_44 = arith.constant dense<0xFF800000> : vector<8xf32>
    %90 = vector.multi_reduction <maximumf>, %89, %cst_44 [1] : vector<8x8xf32> to vector<8xf32>
    %91 = vector.shape_cast %90 : vector<8xf32> to vector<8x1xf32>
    %92 = vector.broadcast %91 : vector<8x1xf32> to vector<8x8xf32>
    %93 = arith.subf %89, %92 : vector<8x8xf32>
    %94 = math.exp %93 : vector<8x8xf32>
    %cst_45 = arith.constant dense<0.000000e+00> : vector<8xf32>
    %95 = vector.multi_reduction <add>, %94, %cst_45 [1] : vector<8x8xf32> to vector<8xf32>
    %96 = vector.shape_cast %95 : vector<8xf32> to vector<8x1xf32>
    %97 = math.log %96 : vector<8x1xf32>
    %98 = vector.broadcast %97 : vector<8x1xf32> to vector<8x8xf32>
    %99 = arith.subf %93, %98 : vector<8x8xf32>
    %c0_46 = arith.constant 0 : index
    %c0_47 = arith.constant 0 : index
    %100 = vector.load %arg3[%c0_46, %c0_47] : memref<8x8xf32, #tpu.memory_space<vmem>>, vector<8x8xf32>
    %101 = arith.addf %99, %100 : vector<8x8xf32>
    %102 = tpu.iota {dimensions = array<i32: 1>} : vector<8x8xi32>
    %cst_48 = arith.constant dense<0xFF800000> : vector<8xf32>
    %103 = vector.multi_reduction <maximumf>, %101, %cst_48 [1] : vector<8x8xf32> to vector<8xf32>
    %104 = vector.shape_cast %103 : vector<8xf32> to vector<8x1xf32>
    %105 = vector.broadcast %104 : vector<8x1xf32> to vector<8x8xf32>
    %106 = arith.cmpf oge, %101, %105 : vector<8x8xf32>
    %c8_i32 = arith.constant 8 : i32
    %107 = vector.broadcast %c8_i32 : i32 to vector<8x8xi32>
    %108 = arith.select %106, %102, %107 : vector<8x8xi1>, vector<8x8xi32>
    %cst_49 = arith.constant dense<2147483647> : vector<8xi32>
    %109 = vector.multi_reduction <minsi>, %108, %cst_49 [1] : vector<8x8xi32> to vector<8xi32>
    %110 = vector.shape_cast %109 : vector<8xi32> to vector<8x1xi32>
    %c7_i32 = arith.constant 7 : i32
    %111 = vector.broadcast %c7_i32 : i32 to vector<8x1xi32>
    %112 = arith.minsi %110, %111 : vector<8x1xi32>
    %113 = vector.broadcast %112 : vector<8x1xi32> to vector<8x8xi32>
    %114 = arith.cmpi eq, %102, %113 : vector<8x8xi32>
    %cst_50 = arith.constant 0.000000e+00 : f32
    %115 = vector.broadcast %cst_50 : f32 to vector<8x8xf32>
    %116 = arith.select %114, %99, %115 : vector<8x8xi1>, vector<8x8xf32>
    %cst_51 = arith.constant dense<0.000000e+00> : vector<8xf32>
    %117 = vector.multi_reduction <add>, %116, %cst_51 [1] : vector<8x8xf32> to vector<8xf32>
    %118 = vector.shape_cast %117 : vector<8xf32> to vector<8x1xf32>
    %119 = vector.shape_cast %112 : vector<8x1xi32> to vector<8x1xi32>
    %120 = vector.broadcast %119 : vector<8x1xi32> to vector<8x128xi32>
    %c0_52 = arith.constant 0 : index
    %c0_53 = arith.constant 0 : index
    %121 = vector.load %arg13[%c0_52, %c0_53] : memref<8x128xi32, #tpu.memory_space<vmem>>, vector<8x128xi32>
    tpu.vector_store %arg13[%c0_52, %c0_53], %120 {strides = array<i32>} : memref<8x128xi32, #tpu.memory_space<vmem>>, vector<8x128xi32>,
    %122 = vector.shape_cast %118 : vector<8x1xf32> to vector<8x1xf32>
    %123 = vector.broadcast %122 : vector<8x1xf32> to vector<8x128xf32>
    %c0_54 = arith.constant 0 : index
    %c0_55 = arith.constant 0 : index
    %124 = vector.load %arg14[%c0_54, %c0_55] : memref<8x128xf32, #tpu.memory_space<vmem>>, vector<8x128xf32>
    tpu.vector_store %arg14[%c0_54, %c0_55], %123 {strides = array<i32>} : memref<8x128xf32, #tpu.memory_space<vmem>>, vector<8x128xf32>,
    return
  }
  func.func @transform_0(%arg0: i32) -> (i32, i32) {
    %c0_i32 = arith.constant 0 : i32
    %c0_i32_0 = arith.constant 0 : i32
    return %arg0, %c0_i32 : i32, i32
  }
  func.func @transform_1(%arg0: i32) -> (i32, i32) {
    %c0_i32 = arith.constant 0 : i32
    %c0_i32_0 = arith.constant 0 : i32
    return %arg0, %c0_i32 : i32, i32
  }
  func.func @transform_2(%arg0: i32) -> (i32, i32) {
    %c0_i32 = arith.constant 0 : i32
    %c0_i32_0 = arith.constant 0 : i32
    return %arg0, %c0_i32 : i32, i32
  }
  func.func @transform_3(%arg0: i32) -> (i32, i32) {
    %c0_i32 = arith.constant 0 : i32
    %c0_i32_0 = arith.constant 0 : i32
    %c0_i32_1 = arith.constant 0 : i32
    return %c0_i32, %c0_i32_0 : i32, i32
  }
  func.func @transform_4(%arg0: i32) -> (i32, i32) {
    %c0_i32 = arith.constant 0 : i32
    %c0_i32_0 = arith.constant 0 : i32
    %c0_i32_1 = arith.constant 0 : i32
    return %c0_i32, %c0_i32_0 : i32, i32
  }
  func.func @transform_5(%arg0: i32) -> (i32, i32) {
    %c0_i32 = arith.constant 0 : i32
    %c0_i32_0 = arith.constant 0 : i32
    %c0_i32_1 = arith.constant 0 : i32
    return %c0_i32, %c0_i32_0 : i32, i32
  }
  func.func @transform_6(%arg0: i32) -> (i32, i32) {
    %c0_i32 = arith.constant 0 : i32
    %c0_i32_0 = arith.constant 0 : i32
    %c0_i32_1 = arith.constant 0 : i32
    return %c0_i32, %c0_i32_0 : i32, i32
  }
  func.func @transform_7(%arg0: i32) -> (i32, i32) {
    %c0_i32 = arith.constant 0 : i32
    %c0_i32_0 = arith.constant 0 : i32
    %c0_i32_1 = arith.constant 0 : i32
    return %c0_i32, %c0_i32_0 : i32, i32
  }
  func.func @transform_8(%arg0: i32) -> (i32, i32) {
    %c0_i32 = arith.constant 0 : i32
    %c0_i32_0 = arith.constant 0 : i32
    %c0_i32_1 = arith.constant 0 : i32
    return %c0_i32, %c0_i32_0 : i32, i32
  }
  func.func @transform_9(%arg0: i32) -> (i32, i32) {
    %c0_i32 = arith.constant 0 : i32
    %c0_i32_0 = arith.constant 0 : i32
    %c0_i32_1 = arith.constant 0 : i32
    return %c0_i32, %c0_i32_0 : i32, i32
  }
  func.func @transform_10(%arg0: i32) -> (i32, i32) {
    %c0_i32 = arith.constant 0 : i32
    %c0_i32_0 = arith.constant 0 : i32
    %c0_i32_1 = arith.constant 0 : i32
    return %c0_i32, %c0_i32_0 : i32, i32
  }
  func.func @transform_11(%arg0: i32) -> (i32, i32) {
    %c0_i32 = arith.constant 0 : i32
    %c0_i32_0 = arith.constant 0 : i32
    %c0_i32_1 = arith.constant 0 : i32
    return %c0_i32, %c0_i32_0 : i32, i32
  }
  func.func @transform_12(%arg0: i32) -> (i32, i32) {
    %c0_i32 = arith.constant 0 : i32
    %c0_i32_0 = arith.constant 0 : i32
    return %arg0, %c0_i32 : i32, i32
  }
  func.func @transform_13(%arg0: i32) -> (i32, i32) {
    %c0_i32 = arith.constant 0 : i32
    %c0_i32_0 = arith.constant 0 : i32
    return %arg0, %c0_i32 : i32, i32
  }
}

</mosaic_0001>

<llo_original>
// kernel: tpu_custom_call.1
$region0: #{tpu_custom_call.1}
  #allocation0 [shape = 'u32[]', space=smem, size = 0x4, offset = 0x4, fixed_abs, tag = 'smem constant byte address 0x4 - core index']
  #allocation1 [shape = 'u32[72,128]{1,0:T(1,128)}', space=vmem, size = 0x9000, scoped, tag = 'internal scratch']
  %s0 = inlined_call_operand.vmem [shape: s32[8,6], index: 0, kind: input, shape index: {}]
  %s1 = inlined_call_operand.vmem [shape: f32[8,16], index: 1, kind: input, shape index: {}]
  %s2 = inlined_call_operand.vmem [shape: f32[8,8], index: 2, kind: input, shape index: {}]
  %s3 = inlined_call_operand.vmem [shape: f32[21,8], index: 3, kind: input, shape index: {}]
  %s4 = inlined_call_operand.vmem [shape: f32[50,8], index: 4, kind: input, shape index: {}]
  %s5 = inlined_call_operand.vmem [shape: f32[3,8], index: 5, kind: input, shape index: {}]
  %s6 = inlined_call_operand.vmem [shape: f32[64,32], index: 6, kind: input, shape index: {}]
  %s7 = inlined_call_operand.vmem [shape: f32[1,32], index: 7, kind: input, shape index: {}]
  %s8 = inlined_call_operand.vmem [shape: f32[32,32], index: 8, kind: input, shape index: {}]
  %s9 = inlined_call_operand.vmem [shape: f32[1,32], index: 9, kind: input, shape index: {}]
  %s10 = inlined_call_operand.vmem [shape: f32[32,8], index: 10, kind: input, shape index: {}]
  %s11 = inlined_call_operand.vmem [shape: f32[1,8], index: 11, kind: input, shape index: {}]
  %s12 = inlined_call_operand.hbm [shape: s32[8,128], index: 12, kind: output, shape index: {0}]
  %s13 = inlined_call_operand.hbm [shape: f32[8,128], index: 13, kind: output, shape index: {1}]
  %14 = xla_tuple %s12, %s13
  %s15 = sld [smem:[#allocation0]]
  $region66: #{tpu_custom_call.1} parent=0
    _
  %s17 = ssub.s32 1, %s15
  %s18 = scalar_select 0, %s17, %s15
  $region1: #{tpu_custom_call.1} parent=0
    #allocation2 [shape = 'u8[4096]{0}', space=vmem, size = 0x1000, scoped, tag = 'output window, operand 0, single buffered']
    #allocation3 [shape = 's32[1]{0}', space=sflag, size = 0x4, scoped, tag = 'scoped memory for tpu_custom_call.1']
    #allocation4 [shape = 'u8[4096]{0}', space=vmem, size = 0x1000, scoped, tag = 'output window, operand 1, single buffered']
    #allocation5 [shape = 's32[1]{0}', space=sflag, size = 0x4, scoped, tag = 'scoped memory for tpu_custom_call.1']
    %19 = vsyncpa [#allocation3], 0
    %20 = vsyncpa [#allocation5], 0
    // Predicated region
    $region2: #{tpu_custom_call.1} parent=1 // pred_check
      _
    $region3: #{tpu_custom_call.1} parent=1 // pred_check_branch
      %22 = sbr.rel (0) target = $region5
    $region4: #{tpu_custom_call.1} parent=1 // pred_region
      _
    $region5: #{tpu_custom_call.1} parent=1 // pred_fallthru
      _
    // Predicated region
    $region6: #{tpu_custom_call.1} parent=1 // pred_check
      _
    $region7: #{tpu_custom_call.1} parent=1 // pred_check_branch
      %24 = sbr.rel (0) target = $region9
    $region8: #{tpu_custom_call.1} parent=1 // pred_region
      _
    $region9: #{tpu_custom_call.1} parent=1 // pred_fallthru
      _
    // Predicated region
    $region10: #{tpu_custom_call.1} parent=1 // pred_check
      _
    $region11: #{tpu_custom_call.1} parent=1 // pred_check_branch
      %26 = sbr.rel (0) target = $region13
    $region12: #{tpu_custom_call.1} parent=1 // pred_region
      _
    $region13: #{tpu_custom_call.1} parent=1 // pred_fallthru
      _
    // Predicated region
    $region14: #{tpu_custom_call.1} parent=1 // pred_check
      _
    $region15: #{tpu_custom_call.1} parent=1 // pred_check_branch
      %28 = sbr.rel (0) target = $region17
    $region16: #{tpu_custom_call.1} parent=1 // pred_region
      _
    $region17: #{tpu_custom_call.1} parent=1 // pred_fallthru
      _
    // Predicated region
    $region18: #{tpu_custom_call.1} parent=1 // pred_check
      _
    $region19: #{tpu_custom_call.1} parent=1 // pred_check_branch
      %30 = sbr.rel (0) target = $region21
    $region20: #{tpu_custom_call.1} parent=1 // pred_region
      _
    $region21: #{tpu_custom_call.1} parent=1 // pred_fallthru
      _
    // Predicated region
    $region22: #{tpu_custom_call.1} parent=1 // pred_check
      _
    $region23: #{tpu_custom_call.1} parent=1 // pred_check_branch
      %32 = sbr.rel (0) target = $region25
    $region24: #{tpu_custom_call.1} parent=1 // pred_region
      _
    $region25: #{tpu_custom_call.1} parent=1 // pred_fallthru
      _
    // Predicated region
    $region26: #{tpu_custom_call.1} parent=1 // pred_check
      _
    $region27: #{tpu_custom_call.1} parent=1 // pred_check_branch
      %34 = sbr.rel (0) target = $region29
    $region28: #{tpu_custom_call.1} parent=1 // pred_region
      _
    $region29: #{tpu_custom_call.1} parent=1 // pred_fallthru
      _
    // Predicated region
    $region30: #{tpu_custom_call.1} parent=1 // pred_check
      _
    $region31: #{tpu_custom_call.1} parent=1 // pred_check_branch
      %36 = sbr.rel (0) target = $region33
    $region32: #{tpu_custom_call.1} parent=1 // pred_region
      _
    $region33: #{tpu_custom_call.1} parent=1 // pred_fallthru
      _
    // Predicated region
    $region34: #{tpu_custom_call.1} parent=1 // pred_check
      _
    $region35: #{tpu_custom_call.1} parent=1 // pred_check_branch
      %38 = sbr.rel (0) target = $region37
    $region36: #{tpu_custom_call.1} parent=1 // pred_region
      _
    $region37: #{tpu_custom_call.1} parent=1 // pred_fallthru
      _
    // Predicated region
    $region38: #{tpu_custom_call.1} parent=1 // pred_check
      _
    $region39: #{tpu_custom_call.1} parent=1 // pred_check_branch
      %40 = sbr.rel (0) target = $region41
    $region40: #{tpu_custom_call.1} parent=1 // pred_region
      _
    $region41: #{tpu_custom_call.1} parent=1 // pred_fallthru
      _
    // Predicated region
    $region42: #{tpu_custom_call.1} parent=1 // pred_check
      _
    $region43: #{tpu_custom_call.1} parent=1 // pred_check_branch
      %42 = sbr.rel (0) target = $region45
    $region44: #{tpu_custom_call.1} parent=1 // pred_region
      _
    $region45: #{tpu_custom_call.1} parent=1 // pred_fallthru
      _
    // Predicated region
    $region46: #{tpu_custom_call.1} parent=1 // pred_check
      _
    $region47: #{tpu_custom_call.1} parent=1 // pred_check_branch
      %44 = sbr.rel (0) target = $region49
    $region48: #{tpu_custom_call.1} parent=1 // pred_region
      _
    $region49: #{tpu_custom_call.1} parent=1 // pred_fallthru
      _
    %v45 = vld [vmem:[%s0] sm:$0xff]
    %v46 = vld [vmem:[%s6] sm:$0xff]
    %v47 = vld [vmem:[%s6 + $0x8] sm:$0xff]
    %v48 = vld [vmem:[%s6 + $0x10] sm:$0xff]
    %v49 = vld [vmem:[%s6 + $0x18] sm:$0xff]
    %v50 = vld [vmem:[%s6 + $0x20] sm:$0xff]
    %v51 = vld [vmem:[%s6 + $0x28] sm:$0xff]
    %v52 = vld [vmem:[%s6 + $0x30] sm:$0xff]
    %v53 = vld [vmem:[%s6 + $0x38] sm:$0xff]
    %v54 = vld [vmem:[%s3] sm:$0xff]
    %v55 = vld [vmem:[%s3 + $0x8] sm:$0xff]
    %v56 = vld [vmem:[%s3 + $0x10] sm:$0x1f]
    %v57 = vlaneseq
    %v58 = vand.u32 %v57, 127
    %59 = vset.pattern.permute.xlu0 0
    %60 = vperm.xlu0 %59, %v45
    %v61 = vpop.permute.xlu0 %60
    %vm62 = vcmp.eq.s32.totalorder %v58, %v61
    %v63 = vsel %vm62, 1, 0
    %v64 = vcvt.s32.f32 %v63
    %vm65 = vcmask 171008
    %v67 = vsel %vm65, %v64, 0
    %vm69 = vcmask 1044480
    %v71 = vsel %vm69, %v56, 0
    %73 = vmatpush.msra.mxu0 0.0
    %74 = vmatpush.msra.mxu0 0.0
    %75 = vmatpush.msra.mxu0 0.0
    %76 = vmatpush.msra.mxu0 0.0
    %77 = vmatpush.msra.mxu0 0.0
    %78 = vmatpush.msra.mxu0 0.0
    %79 = vmatpush.msra.mxu0 0.0
    %80 = vmatpush.msra.mxu0 0.0
    %81 = vmatpush.msra.mxu0 0.0
    %82 = vmatpush.msra.mxu0 0.0
    %83 = vmatpush.msra.mxu0 0.0
    %84 = vmatpush.msra.mxu0 0.0
    %85 = vmatpush.msra.mxu0 0.0
    %86 = vmatpush.msra.mxu0 %v71
    %87 = vmatpush.msra.mxu0 %v55
    %88 = vmatpush.msra.mxu0 %v54
    %89 = vmatmul.f32.gmra.mxu0 %v67
    %v90 = vpop.f32.mrf.mxu0
    %v91 = vadd.f32 0.0, %v90
    %92 = vdwg.mxu0
    %93 = vset.pattern.permute.xlu0 1
    %94 = vperm.xlu0 %93, %v45
    %v95 = vpop.permute.xlu0 %94
    %vm96 = vcmp.eq.s32.totalorder %v58, %v95
    %v97 = vsel %vm96, 1, 0
    %v98 = vcvt.s32.f32 %v97
    %v100 = vsel %vm65, %v98, 0
    %102 = vmatpush.msra.mxu0 0.0
    %103 = vmatpush.msra.mxu0 0.0
    %104 = vmatpush.msra.mxu0 0.0
    %105 = vmatpush.msra.mxu0 0.0
    %106 = vmatpush.msra.mxu0 0.0
    %107 = vmatpush.msra.mxu0 0.0
    %108 = vmatpush.msra.mxu0 0.0
    %109 = vmatpush.msra.mxu0 0.0
    %110 = vmatpush.msra.mxu0 0.0
    %111 = vmatpush.msra.mxu0 0.0
    %112 = vmatpush.msra.mxu0 0.0
    %113 = vmatpush.msra.mxu0 0.0
    %114 = vmatpush.msra.mxu0 0.0
    %115 = vmatpush.msra.mxu0 %v71
    %116 = vmatpush.msra.mxu0 %v55
    %117 = vmatpush.msra.mxu0 %v54
    %118 = vmatmul.f32.gmra.mxu0 %v100
    %v119 = vpop.f32.mrf.mxu0
    %v120 = vadd.f32 0.0, %v119
    %121 = vdwg.mxu0
    %vm122 = vcmask 64512
    %v124 = vsel %vm122, %v120, 0
    %126 = vmatpush.msra.mxu0 0.0
    %127 = vmatpush.msra.mxu0 0.0
    %128 = vmatpush.msra.mxu0 0.0
    %129 = vmatpush.msra.mxu0 0.0
    %130 = vmatpush.msra.mxu0 0.0
    %131 = vmatpush.msra.mxu0 0.0
    %132 = vmatpush.msra.mxu0 0.0
    %133 = vmatpush.msra.mxu0 0.0
    %134 = vmatpush.msra.mxu0 0.0
    %135 = vmatpush.msra.mxu0 0.0
    %136 = vmatpush.msra.mxu0 0.0
    %137 = vmatpush.msra.mxu0 0.0
    %138 = vmatpush.msra.mxu0 0.0
    %139 = vmatpush.msra.mxu0 0.0
    %140 = vmatpush.msra.mxu0 0.0
    %141 = vmatpush.msra.mxu0 %v47
    %142 = vmatmul.f32.gmra.mxu0 %v124
    %v143 = vpop.f32.mrf.mxu0
    %v144 = vadd.f32 0.0, %v143
    %145 = vdwg.mxu0
    %v147 = vsel %vm122, %v91, 0
    %149 = vmatpush.msra.mxu0 0.0
    %150 = vmatpush.msra.mxu0 0.0
    %151 = vmatpush.msra.mxu0 0.0
    %152 = vmatpush.msra.mxu0 0.0
    %153 = vmatpush.msra.mxu0 0.0
    %154 = vmatpush.msra.mxu0 0.0
    %155 = vmatpush.msra.mxu0 0.0
    %156 = vmatpush.msra.mxu0 0.0
    %157 = vmatpush.msra.mxu0 0.0
    %158 = vmatpush.msra.mxu0 0.0
    %159 = vmatpush.msra.mxu0 0.0
    %160 = vmatpush.msra.mxu0 0.0
    %161 = vmatpush.msra.mxu0 0.0
    %162 = vmatpush.msra.mxu0 0.0
    %163 = vmatpush.msra.mxu0 0.0
    %164 = vmatpush.msra.mxu0 %v46
    %165 = vmatmul.f32.gmra.mxu0 %v147
    %v166 = vpop.f32.mrf.mxu0
    %v167 = vadd.f32 %v144, %v166
    %168 = vdwg.mxu0
    %169 = vset.pattern.permute.xlu0 2
    %170 = vperm.xlu0 %169, %v45
    %v171 = vpop.permute.xlu0 %170
    %vm172 = vcmp.eq.s32.totalorder %v58, %v171
    %v173 = vsel %vm172, 1, 0
    %v174 = vcvt.s32.f32 %v173
    %v176 = vsel %vm65, %v174, 0
    %178 = vmatpush.msra.mxu0 0.0
    %179 = vmatpush.msra.mxu0 0.0
    %180 = vmatpush.msra.mxu0 0.0
    %181 = vmatpush.msra.mxu0 0.0
    %182 = vmatpush.msra.mxu0 0.0
    %183 = vmatpush.msra.mxu0 0.0
    %184 = vmatpush.msra.mxu0 0.0
    %185 = vmatpush.msra.mxu0 0.0
    %186 = vmatpush.msra.mxu0 0.0
    %187 = vmatpush.msra.mxu0 0.0
    %188 = vmatpush.msra.mxu0 0.0
    %189 = vmatpush.msra.mxu0 0.0
    %190 = vmatpush.msra.mxu0 0.0
    %191 = vmatpush.msra.mxu0 %v71
    %192 = vmatpush.msra.mxu0 %v55
    %193 = vmatpush.msra.mxu0 %v54
    %194 = vmatmul.f32.gmra.mxu0 %v176
    %v195 = vpop.f32.mrf.mxu0
    %v196 = vadd.f32 0.0, %v195
    %197 = vdwg.mxu0
    %v199 = vsel %vm122, %v196, 0
    %201 = vmatpush.msra.mxu0 0.0
    %202 = vmatpush.msra.mxu0 0.0
    %203 = vmatpush.msra.mxu0 0.0
    %204 = vmatpush.msra.mxu0 0.0
    %205 = vmatpush.msra.mxu0 0.0
    %206 = vmatpush.msra.mxu0 0.0
    %207 = vmatpush.msra.mxu0 0.0
    %208 = vmatpush.msra.mxu0 0.0
    %209 = vmatpush.msra.mxu0 0.0
    %210 = vmatpush.msra.mxu0 0.0
    %211 = vmatpush.msra.mxu0 0.0
    %212 = vmatpush.msra.mxu0 0.0
    %213 = vmatpush.msra.mxu0 0.0
    %214 = vmatpush.msra.mxu0 0.0
    %215 = vmatpush.msra.mxu0 0.0
    %216 = vmatpush.msra.mxu0 %v48
    %217 = vmatmul.f32.gmra.mxu0 %v199
    %v218 = vpop.f32.mrf.mxu0
    %v219 = vadd.f32 0.0, %v218
    %220 = vdwg.mxu0
    %v221 = vadd.f32 %v167, %v219
    %222 = vset.pattern.permute.xlu0 3
    %223 = vperm.xlu0 %222, %v45
    %v224 = vpop.permute.xlu0 %223
    %vm225 = vcmp.eq.s32.totalorder %v58, %v224
    %v226 = vsel %vm225, 1, 0
    %v227 = vcvt.s32.f32 %v226
    %v229 = vsel %vm65, %v227, 0
    %231 = vmatpush.msra.mxu0 0.0
    %232 = vmatpush.msra.mxu0 0.0
    %233 = vmatpush.msra.mxu0 0.0
    %234 = vmatpush.msra.mxu0 0.0
    %235 = vmatpush.msra.mxu0 0.0
    %236 = vmatpush.msra.mxu0 0.0
    %237 = vmatpush.msra.mxu0 0.0
    %238 = vmatpush.msra.mxu0 0.0
    %239 = vmatpush.msra.mxu0 0.0
    %240 = vmatpush.msra.mxu0 0.0
    %241 = vmatpush.msra.mxu0 0.0
    %242 = vmatpush.msra.mxu0 0.0
    %243 = vmatpush.msra.mxu0 0.0
    %244 = vmatpush.msra.mxu0 %v71
    %245 = vmatpush.msra.mxu0 %v55
    %246 = vmatpush.msra.mxu0 %v54
    %247 = vmatmul.f32.gmra.mxu0 %v229
    %v248 = vpop.f32.mrf.mxu0
    %v249 = vadd.f32 0.0, %v248
    %250 = vdwg.mxu0
    %v252 = vsel %vm122, %v249, 0
    %254 = vmatpush.msra.mxu0 0.0
    %255 = vmatpush.msra.mxu0 0.0
    %256 = vmatpush.msra.mxu0 0.0
    %257 = vmatpush.msra.mxu0 0.0
    %258 = vmatpush.msra.mxu0 0.0
    %259 = vmatpush.msra.mxu0 0.0
    %260 = vmatpush.msra.mxu0 0.0
    %261 = vmatpush.msra.mxu0 0.0
    %262 = vmatpush.msra.mxu0 0.0
    %263 = vmatpush.msra.mxu0 0.0
    %264 = vmatpush.msra.mxu0 0.0
    %265 = vmatpush.msra.mxu0 0.0
    %266 = vmatpush.msra.mxu0 0.0
    %267 = vmatpush.msra.mxu0 0.0
    %268 = vmatpush.msra.mxu0 0.0
    %269 = vmatpush.msra.mxu0 %v49
    %270 = vmatmul.f32.gmra.mxu0 %v252
    %v271 = vpop.f32.mrf.mxu0
    %v272 = vadd.f32 0.0, %v271
    %273 = vdwg.mxu0
    %v274 = vadd.f32 %v221, %v272
    %v275 = vld [vmem:[%s4] sm:$0xff]
    %v276 = vld [vmem:[%s4 + $0x8] sm:$0xff]
    %v277 = vld [vmem:[%s4 + $0x10] sm:$0xff]
    %v278 = vld [vmem:[%s4 + $0x18] sm:$0xff]
    %v279 = vld [vmem:[%s4 + $0x20] sm:$0xff]
    %v280 = vld [vmem:[%s4 + $0x28] sm:$0xff]
    %v281 = vld [vmem:[%s4 + $0x30] sm:$0x3]
    %282 = vset.pattern.permute.xlu0 4
    %283 = vperm.xlu0 %282, %v45
    %v284 = vpop.permute.xlu0 %283
    %vm285 = vcmp.eq.s32.totalorder %v58, %v284
    %v286 = vsel %vm285, 1, 0
    %v287 = vcvt.s32.f32 %v286
    %vm288 = vcmask 408576
    %v290 = vsel %vm288, %v287, 0
    %vm292 = vcmask 1041408
    %v294 = vsel %vm292, %v281, 0
    %296 = vmatpush.msra.mxu0 0.0
    %297 = vmatpush.msra.mxu0 0.0
    %298 = vmatpush.msra.mxu0 0.0
    %299 = vmatpush.msra.mxu0 0.0
    %300 = vmatpush.msra.mxu0 0.0
    %301 = vmatpush.msra.mxu0 0.0
    %302 = vmatpush.msra.mxu0 0.0
    %303 = vmatpush.msra.mxu0 0.0
    %304 = vmatpush.msra.mxu0 0.0
    %305 = vmatpush.msra.mxu0 %v294
    %306 = vmatpush.msra.mxu0 %v280
    %307 = vmatpush.msra.mxu0 %v279
    %308 = vmatpush.msra.mxu0 %v278
    %309 = vmatpush.msra.mxu0 %v277
    %310 = vmatpush.msra.mxu0 %v276
    %311 = vmatpush.msra.mxu0 %v275
    %312 = vmatmul.f32.gmra.mxu0 %v290
    %v313 = vpop.f32.mrf.mxu0
    %v314 = vadd.f32 0.0, %v313
    %315 = vdwg.mxu0
    %v317 = vsel %vm122, %v314, 0
    %319 = vmatpush.msra.mxu0 0.0
    %320 = vmatpush.msra.mxu0 0.0
    %321 = vmatpush.msra.mxu0 0.0
    %322 = vmatpush.msra.mxu0 0.0
    %323 = vmatpush.msra.mxu0 0.0
    %324 = vmatpush.msra.mxu0 0.0
    %325 = vmatpush.msra.mxu0 0.0
    %326 = vmatpush.msra.mxu0 0.0
    %327 = vmatpush.msra.mxu0 0.0
    %328 = vmatpush.msra.mxu0 0.0
    %329 = vmatpush.msra.mxu0 0.0
    %330 = vmatpush.msra.mxu0 0.0
    %331 = vmatpush.msra.mxu0 0.0
    %332 = vmatpush.msra.mxu0 0.0
    %333 = vmatpush.msra.mxu0 0.0
    %334 = vmatpush.msra.mxu0 %v50
    %335 = vmatmul.f32.gmra.mxu0 %v317
    %v336 = vpop.f32.mrf.mxu0
    %v337 = vadd.f32 0.0, %v336
    %338 = vdwg.mxu0
    %v339 = vadd.f32 %v274, %v337
    %v340 = vld [vmem:[%s5] sm:$0x7]
    %341 = vset.pattern.permute.xlu0 5
    %342 = vperm.xlu0 %341, %v45
    %v343 = vpop.permute.xlu0 %342
    %vm344 = vcmp.eq.s32.totalorder %v58, %v343
    %v345 = vsel %vm344, 1, 0
    %v346 = vcvt.s32.f32 %v345
    %vm347 = vcmask 23552
    %v349 = vsel %vm347, %v346, 0
    %vm351 = vcmask 1042432
    %v353 = vsel %vm351, %v340, 0
    %355 = vmatpush.msra.mxu0 0.0
    %356 = vmatpush.msra.mxu0 0.0
    %357 = vmatpush.msra.mxu0 0.0
    %358 = vmatpush.msra.mxu0 0.0
    %359 = vmatpush.msra.mxu0 0.0
    %360 = vmatpush.msra.mxu0 0.0
    %361 = vmatpush.msra.mxu0 0.0
    %362 = vmatpush.msra.mxu0 0.0
    %363 = vmatpush.msra.mxu0 0.0
    %364 = vmatpush.msra.mxu0 0.0
    %365 = vmatpush.msra.mxu0 0.0
    %366 = vmatpush.msra.mxu0 0.0
    %367 = vmatpush.msra.mxu0 0.0
    %368 = vmatpush.msra.mxu0 0.0
    %369 = vmatpush.msra.mxu0 0.0
    %370 = vmatpush.msra.mxu0 %v353
    %371 = vmatmul.f32.gmra.mxu0 %v349
    %v372 = vpop.f32.mrf.mxu0
    %v373 = vadd.f32 0.0, %v372
    %374 = vdwg.mxu0
    %v376 = vsel %vm122, %v373, 0
    %378 = vmatpush.msra.mxu0 0.0
    %379 = vmatpush.msra.mxu0 0.0
    %380 = vmatpush.msra.mxu0 0.0
    %381 = vmatpush.msra.mxu0 0.0
    %382 = vmatpush.msra.mxu0 0.0
    %383 = vmatpush.msra.mxu0 0.0
    %384 = vmatpush.msra.mxu0 0.0
    %385 = vmatpush.msra.mxu0 0.0
    %386 = vmatpush.msra.mxu0 0.0
    %387 = vmatpush.msra.mxu0 0.0
    %388 = vmatpush.msra.mxu0 0.0
    %389 = vmatpush.msra.mxu0 0.0
    %390 = vmatpush.msra.mxu0 0.0
    %391 = vmatpush.msra.mxu0 0.0
    %392 = vmatpush.msra.mxu0 0.0
    %393 = vmatpush.msra.mxu0 %v51
    %394 = vmatmul.f32.gmra.mxu0 %v376
    %v395 = vpop.f32.mrf.mxu0
    %v396 = vadd.f32 0.0, %v395
    %397 = vdwg.mxu0
    %v398 = vadd.f32 %v339, %v396
    %v399 = vld [vmem:[%s1] sm:$0xff]
    %vm400 = vcmask 130048
    %v402 = vsel %vm400, %v399, 0
    %404 = vmatpush.msra.mxu0 0.0
    %405 = vmatpush.msra.mxu0 0.0
    %406 = vmatpush.msra.mxu0 0.0
    %407 = vmatpush.msra.mxu0 0.0
    %408 = vmatpush.msra.mxu0 0.0
    %409 = vmatpush.msra.mxu0 0.0
    %410 = vmatpush.msra.mxu0 0.0
    %411 = vmatpush.msra.mxu0 0.0
    %412 = vmatpush.msra.mxu0 0.0
    %413 = vmatpush.msra.mxu0 0.0
    %414 = vmatpush.msra.mxu0 0.0
    %415 = vmatpush.msra.mxu0 0.0
    %416 = vmatpush.msra.mxu0 0.0
    %417 = vmatpush.msra.mxu0 0.0
    %418 = vmatpush.msra.mxu0 %v53
    %419 = vmatpush.msra.mxu0 %v52
    %420 = vmatmul.f32.gmra.mxu0 %v402
    %v421 = vpop.f32.mrf.mxu0
    %v422 = vadd.f32 0.0, %v421
    %423 = vdwg.mxu0
    %v424 = vadd.f32 %v398, %v422
    %v425 = vld [vmem:[%s7] sm:$0x1]
    %v427 = vperm.slane %v425, 0
    %v429 = vadd.f32 %v424, %v427
    %v430 = vmax.f32 %v429, 0.0
    %v431 = vld [vmem:[%s8] sm:$0xff]
    %v432 = vld [vmem:[%s8 + $0x8] sm:$0xff]
    %v433 = vld [vmem:[%s8 + $0x10] sm:$0xff]
    %v434 = vld [vmem:[%s8 + $0x18] sm:$0xff]
    %v435 = vld [vmem:[%s9] sm:$0x1]
    %v437 = vperm.slane %v435, 0
    %vm439 = vcmask 261120
    %v441 = vsel %vm439, %v430, 0
    %443 = vmatpush.msra.mxu0 0.0
    %444 = vmatpush.msra.mxu0 0.0
    %445 = vmatpush.msra.mxu0 0.0
    %446 = vmatpush.msra.mxu0 0.0
    %447 = vmatpush.msra.mxu0 0.0
    %448 = vmatpush.msra.mxu0 0.0
    %449 = vmatpush.msra.mxu0 0.0
    %450 = vmatpush.msra.mxu0 0.0
    %451 = vmatpush.msra.mxu0 0.0
    %452 = vmatpush.msra.mxu0 0.0
    %453 = vmatpush.msra.mxu0 0.0
    %454 = vmatpush.msra.mxu0 0.0
    %455 = vmatpush.msra.mxu0 %v434
    %456 = vmatpush.msra.mxu0 %v433
    %457 = vmatpush.msra.mxu0 %v432
    %458 = vmatpush.msra.mxu0 %v431
    %459 = vmatmul.f32.gmra.mxu0 %v441
    %v460 = vpop.f32.mrf.mxu0
    %v461 = vadd.f32 %v437, %v460
    %462 = vdwg.mxu0
    %v463 = vmax.f32 %v461, 0.0
    %v464 = vld [vmem:[%s10] sm:$0xff]
    %v465 = vld [vmem:[%s10 + $0x8] sm:$0xff]
    %v466 = vld [vmem:[%s10 + $0x10] sm:$0xff]
    %v467 = vld [vmem:[%s10 + $0x18] sm:$0xff]
    %v468 = vld [vmem:[%s11] sm:$0x1]
    %v470 = vperm.slane %v468, 0
    %v473 = vsel %vm439, %v463, 0
    %475 = vmatpush.msra.mxu0 0.0
    %476 = vmatpush.msra.mxu0 0.0
    %477 = vmatpush.msra.mxu0 0.0
    %478 = vmatpush.msra.mxu0 0.0
    %479 = vmatpush.msra.mxu0 0.0
    %480 = vmatpush.msra.mxu0 0.0
    %481 = vmatpush.msra.mxu0 0.0
    %482 = vmatpush.msra.mxu0 0.0
    %483 = vmatpush.msra.mxu0 0.0
    %484 = vmatpush.msra.mxu0 0.0
    %485 = vmatpush.msra.mxu0 0.0
    %486 = vmatpush.msra.mxu0 0.0
    %487 = vmatpush.msra.mxu0 %v467
    %488 = vmatpush.msra.mxu0 %v466
    %489 = vmatpush.msra.mxu0 %v465
    %490 = vmatpush.msra.mxu0 %v464
    %491 = vmatmul.f32.gmra.mxu0 %v473
    %v492 = vpop.f32.mrf.mxu0
    %v493 = vadd.f32 %v470, %v492
    %494 = vdwg.mxu0
    %v495 = vsel %vm122, %v493, -inf
    %496 = vmax.xlane.f32.xlu0 %v495
    %v497 = vpop.xlane.xlu0 %496
    %v498 = vsub.f32 %v493, %v497
    %v499 = vmul.f32 %v498, 1.442695
    %v500 = vpow.pop %v499
    %v501 = vsel %vm122, %v500, 0.0
    %502 = vadd.xlane.f32.xlu0 %v501
    %v503 = vpop.xlane.xlu0 %502
    %v504 = vlog2.pop %v503
    %v505 = vmul.f32 %v504, 0.6931472
    %v506 = vsub.f32 %v498, %v505
    %v507 = vld [vmem:[%s2] sm:$0xff]
    %v508 = vadd.f32 %v506, %v507
    %v509 = vsel %vm122, %v508, -inf
    %510 = vmax.xlane.f32.xlu0 %v509
    %v511 = vpop.xlane.xlu0 %510
    %vm512 = vcmp.ge.f32.partialorder %v508, %v511
    %v513 = vsel %vm512, %v58, 8
    %v514 = vsel %vm122, %v513, 2147483647
    %v515 = vand.u32 %v514, 65535
    %v516 = vshra.s32 %v514, 16
    %v517 = vcvt.s32.f32 %v515
    %v518 = vcvt.s32.f32 %v516
    %519 = vmin.xlane.f32.xlu0 %v518
    %v520 = vpop.xlane.xlu0 %519
    %vm521 = vcmp.eq.f32.partialorder %v518, %v520
    %v522 = vsel %vm521, %v517, inf
    %523 = vmin.xlane.f32.xlu0 %v522
    %v524 = vpop.xlane.xlu0 %523
    %v525 = vcvt.f32.s32 %v524
    %v526 = vcvt.f32.s32 %v520
    %v527 = vshll.u32 %v526, 16
    %v528 = vadd.s32 %v527, %v525
    %vm529 = vcmp.lt.s32.totalorder %v528, 7
    %v530 = vsel %vm529, %v528, 7
    %vm531 = vcmp.eq.s32.totalorder %v58, %v530
    %v532 = vsel %vm531, %v506, 0.0
    %v533 = vsel %vm122, %v532, 0.0
    %534 = vadd.xlane.f32.xlu0 %v533
    %v535 = vpop.xlane.xlu0 %534
    %536 = vst [vmem:[#allocation2] sm:$0xff] %v530
    %537 = vst [vmem:[#allocation4] sm:$0xff] %v535
    // Predicated region
    $region50: #{tpu_custom_call.1} parent=1 // pred_check
      _
    $region51: #{tpu_custom_call.1} parent=1 // pred_check_branch
      %539 = sbr.rel (0) target = $region53
    $region52: #{tpu_custom_call.1} parent=1 // pred_region
      %541 = vsyncadd [#allocation3], 0
      %s543 = sshll.u32 [#allocation2], 4
      %s544 = int_to_ptr.vmem [resolvable:$true] %s543
      %s545 = sshll.u32 %s12, 4
      %s546 = int_to_ptr.hbm [resolvable:$true] %s545
      %548 = dma.vmem_to_hbm [thread:$0]  %s544, 128, %s546, [#allocation3]
    $region53: #{tpu_custom_call.1} parent=1 // pred_fallthru
      _
    // Predicated region
    $region54: #{tpu_custom_call.1} parent=1 // pred_check
      _
    $region55: #{tpu_custom_call.1} parent=1 // pred_check_branch
      %550 = sbr.rel (0) target = $region57
    $region56: #{tpu_custom_call.1} parent=1 // pred_region
      %552 = vsyncadd [#allocation5], 0
      %s554 = sshll.u32 [#allocation4], 4
      %s555 = int_to_ptr.vmem [resolvable:$true] %s554
      %s556 = sshll.u32 %s13, 4
      %s557 = int_to_ptr.hbm [resolvable:$true] %s556
      %559 = dma.vmem_to_hbm [thread:$0]  %s555, 128, %s557, [#allocation5]
    $region57: #{tpu_custom_call.1} parent=1 // pred_fallthru
      _
    // Predicated region
    $region58: #{tpu_custom_call.1} parent=1 // pred_check
      _
    $region59: #{tpu_custom_call.1} parent=1 // pred_check_branch
      %561 = sbr.rel (0) target = $region61
    $region60: #{tpu_custom_call.1} parent=1 // pred_region
      %563 = dma.done [#allocation3], 128
    $region61: #{tpu_custom_call.1} parent=1 // pred_fallthru
      _
    // Predicated region
    $region62: #{tpu_custom_call.1} parent=1 // pred_check
      _
    $region63: #{tpu_custom_call.1} parent=1 // pred_check_branch
      %565 = sbr.rel (0) target = $region65
    $region64: #{tpu_custom_call.1} parent=1 // pred_region
      %567 = dma.done [#allocation5], 128
    $region65: #{tpu_custom_call.1} parent=1 // pred_fallthru
      _
    %568 = vsyncpa [#allocation3], 1
    %569 = vsyncpa [#allocation5], 1

</llo_original>
